<compile_context>
chip_gen: v5e
topology: v5e:2x2
jax: 0.10.0
libtpu: 0.0.40
codegen_flags: <defaults>
</compile_context>

<pallas_src>
import jax
import jax.numpy as jnp
from jax.experimental import pallas as pl
from jax.experimental.pallas import tpu as pltpu

EPS = 1e-5


def _round_up(n, m):
    return ((n + m - 1) // m) * m


def _vmem_limit_bytes():
    # Generation-aware VMEM budget (v5e/v6e: 128 MiB physical, v7x: 64 MiB).
    cap = 64 * 1024 * 1024
    try:
        info = pltpu.get_tpu_info()
        cap = int(getattr(info, "vmem_capacity_bytes", cap) or cap)
    except Exception:
        pass
    return int(min(cap * 3 // 4, 100 * 1024 * 1024))


def _cparams(*sems):
    return pltpu.CompilerParams(dimension_semantics=sems,
                                vmem_limit_bytes=_vmem_limit_bytes())


# --------------------------------------------------------------------------
# Kernels
# --------------------------------------------------------------------------
def _matmul_stats_kernel(p_ref, w_ref, *out_refs):
    # y = p @ w (f32 accumulate), split along N into lane-dense slabs, plus
    # per-channel sum / sum-of-squares accumulated across the inner grid axis.
    *y_refs, sum_ref, ssq_ref = out_refs
    y = jnp.dot(p_ref[...], w_ref[...], preferred_element_type=jnp.float32)

    part = y.shape[1] // len(y_refs)
    for idx, y_out in enumerate(y_refs):
        y_out[...] = y[:, idx * part:(idx + 1) * part].astype(y_out.dtype)

    @pl.when(pl.program_id(1) == 0)
    def _():
        sum_ref[...] = jnp.zeros_like(sum_ref)
        ssq_ref[...] = jnp.zeros_like(ssq_ref)

    sum_ref[...] += jnp.sum(y, axis=0, keepdims=True)[None]
    ssq_ref[...] += jnp.sum(y * y, axis=0, keepdims=True)[None]


def _conv2_halo_kernel(y1p_ref, w_ref, scale_ref, shift_ref, mask_ref,
                       y2_ref, sum_ref, ssq_ref, h_scr, acc_scr):
    # Fused bn1+ReLU + 3x3/stride-1 halo conv + per-channel stats.
    hp, wp, c = h_scr.shape
    ho, wo = hp - 2, wp - 2

    # bn1 + ReLU; the mask re-zeros the 1-pixel border so it acts exactly as
    # conv2's zero padding (VALU/EUP work, hidden under the tap matmuls).
    scale = scale_ref[...].reshape(1, 1, c)
    shift = shift_ref[...].reshape(1, 1, c)
    y1 = y1p_ref[0].astype(jnp.float32)
    h = jnp.maximum(y1 * scale + shift, 0.0) * mask_ref[...]
    h_scr[...] = h.astype(h_scr.dtype)

    acc_scr[...] = jnp.zeros_like(acc_scr)
    for kh in range(3):                       # static 9-tap unroll
        for kw in range(3):
            tap = h_scr[kh:kh + ho, kw:kw + wo, :].reshape(ho * wo, c)
            acc_scr[...] += jnp.dot(tap, w_ref[kh * 3 + kw],
                                    preferred_element_type=jnp.float32)

    y2 = acc_scr[...]
    y2_ref[...] = y2.astype(y2_ref.dtype)

    @pl.when(pl.program_id(1) == 0)
    def _():
        sum_ref[...] = jnp.zeros_like(sum_ref)
        ssq_ref[...] = jnp.zeros_like(ssq_ref)

    sum_ref[...] += jnp.sum(y2, axis=0, keepdims=True)[None]
    ssq_ref[...] += jnp.sum(y2 * y2, axis=0, keepdims=True)[None]


def _bn_relu_kernel(y_ref, scale_ref, shift_ref, h_ref):
    h = y_ref[...].astype(jnp.float32) * scale_ref[...] + shift_ref[...]
    h_ref[...] = jnp.maximum(h, 0.0).astype(h_ref.dtype)


def _bn_add_relu_proj_kernel(y2_ref, ysc_ref, s2_ref, t2_ref, ss_ref, ts_ref, o_ref):
    cout = o_ref.shape[-1]
    a = y2_ref[...].astype(jnp.float32) * s2_ref[...] + t2_ref[...]
    b = ysc_ref[...].astype(jnp.float32) * ss_ref[...] + ts_ref[...]
    o_ref[...] = jnp.maximum(a + b, 0.0)[:, :cout].astype(o_ref.dtype)


def _bn_add_relu_id_kernel(y2_ref, x_ref, s2_ref, t2_ref, o_ref):
    cout = o_ref.shape[-1]
    a = y2_ref[...].astype(jnp.float32) * s2_ref[...] + t2_ref[...]
    o_ref[...] = jnp.maximum(a[:, :cout] + x_ref[...].astype(jnp.float32),
                             0.0).astype(o_ref.dtype)


# --------------------------------------------------------------------------
# pallas_call wrappers
# --------------------------------------------------------------------------
def _matmul_stats(p, w, n_imgs, rows_per_img, n_y_outputs, out_dtype):
    """y = p @ w, one image (rows_per_img rows) per grid step, with fused
    per-channel (mean, rstd).  Grid = (parallel split, arbitrary chunk) with
    per-split stats accumulators (megacore-safe), reduced afterwards."""
    m, k = p.shape
    width = w.shape[1]
    part = width // n_y_outputs
    nsplit = 2 if (n_imgs % 2 == 0 and n_imgs >= 2) else 1
    chunks = n_imgs // nsplit

    row_map = lambda sp, ii: (sp * chunks + ii, 0)
    stat_map = lambda sp, ii: (sp, 0, 0)

    cost = pl.CostEstimate(
        flops=2 * m * k * width, transcendentals=0,
        bytes_accessed=int(p.size * p.dtype.itemsize + w.size * w.dtype.itemsize
                           + m * width * jnp.dtype(out_dtype).itemsize))

    out_shape = tuple(jax.ShapeDtypeStruct((m, part), out_dtype)
                      for _ in range(n_y_outputs)) + (
        jax.ShapeDtypeStruct((nsplit, 1, width), jnp.float32),
        jax.ShapeDtypeStruct((nsplit, 1, width), jnp.float32))
    out_specs = tuple(pl.BlockSpec((rows_per_img, part), row_map)
                      for _ in range(n_y_outputs)) + (
        pl.BlockSpec((1, 1, width), stat_map),
        pl.BlockSpec((1, 1, width), stat_map))

    outs = pl.pallas_call(
        _matmul_stats_kernel,
        out_shape=out_shape,
        grid=(nsplit, chunks),
        in_specs=[pl.BlockSpec((rows_per_img, k), row_map),
                  pl.BlockSpec((k, width), lambda sp, ii: (0, 0))],  # resident
        out_specs=out_specs,
        compiler_params=_cparams("parallel", "arbitrary"),
        cost_estimate=cost,
    )(p, w)
    *ys, s, ss = outs
    s = jnp.sum(s, axis=(0, 1))
    ss = jnp.sum(ss, axis=(0, 1))
    mean = s / m
    # TODO(synk): E[y^2]-E[y]^2 in f32 can cancel at very large M; fine here.
    var = jnp.maximum(ss / m - mean * mean, 0.0)
    return list(ys), mean, jax.lax.rsqrt(var + EPS)


def _conv2_halo(y1p, w2taps, scale1, shift1, mask, n_imgs, ho, wo, out_dtype):
    """conv2 (3x3, stride 1) as in-kernel halo conv with fused bn1+ReLU."""
    _, hp, wp, c = y1p.shape
    cout_p = w2taps.shape[-1]
    rows = ho * wo
    m = n_imgs * rows
    nsplit = 2 if (n_imgs % 2 == 0 and n_imgs >= 2) else 1
    chunks = n_imgs // nsplit

    img_map = lambda sp, ii: (sp * chunks + ii, 0, 0, 0)
    row_map = lambda sp, ii: (sp * chunks + ii, 0)
    stat_map = lambda sp, ii: (sp, 0, 0)
    const2 = lambda sp, ii: (0, 0)
    const3 = lambda sp, ii: (0, 0, 0)

    cost = pl.CostEstimate(
        flops=2 * m * c * cout_p * 9, transcendentals=0,
        bytes_accessed=int(y1p.size * y1p.dtype.itemsize
                           + w2taps.size * w2taps.dtype.itemsize
                           + m * cout_p * jnp.dtype(out_dtype).itemsize))

    y2, s, ss = pl.pallas_call(
        _conv2_halo_kernel,
        out_shape=(jax.ShapeDtypeStruct((m, cout_p), out_dtype),
                   jax.ShapeDtypeStruct((nsplit, 1, cout_p), jnp.float32),
                   jax.ShapeDtypeStruct((nsplit, 1, cout_p), jnp.float32)),
        grid=(nsplit, chunks),
        in_specs=[pl.BlockSpec((1, hp, wp, c), img_map),      # padded image
                  pl.BlockSpec((9, c, cout_p), const3),       # resident taps
                  pl.BlockSpec((1, c), const2),               # bn1 scale
                  pl.BlockSpec((1, c), const2),               # bn1 shift
                  pl.BlockSpec((hp, wp, 1), const3)],         # border mask
        out_specs=(pl.BlockSpec((rows, cout_p), row_map),
                   pl.BlockSpec((1, 1, cout_p), stat_map),
                   pl.BlockSpec((1, 1, cout_p), stat_map)),
        scratch_shapes=[pltpu.VMEM((hp, wp, c), y1p.dtype),
                        pltpu.VMEM((rows, cout_p), jnp.float32)],
        compiler_params=_cparams("parallel", "arbitrary"),
        cost_estimate=cost,
    )(y1p, w2taps, scale1, shift1, mask)
    s = jnp.sum(s, axis=(0, 1))
    ss = jnp.sum(ss, axis=(0, 1))
    mean = s / m
    var = jnp.maximum(ss / m - mean * mean, 0.0)
    return y2, mean, jax.lax.rsqrt(var + EPS)


def _bn_relu(y, scale, shift, n_imgs, rows, out_dtype):
    m, cpw = y.shape
    return pl.pallas_call(
        _bn_relu_kernel,
        out_shape=jax.ShapeDtypeStruct((m, cpw), out_dtype),
        grid=(n_imgs,),
        in_specs=[pl.BlockSpec((rows, cpw), lambda i: (i, 0)),
                  pl.BlockSpec((1, cpw), lambda i: (0, 0)),
                  pl.BlockSpec((1, cpw), lambda i: (0, 0))],
        out_specs=pl.BlockSpec((rows, cpw), lambda i: (i, 0)),
        compiler_params=_cparams("parallel"),
    )(y, scale, shift)


def _bn_add_relu_proj(y2, ysc, s2, t2, ssc, tsc, n_imgs, rows, cout):
    m, cpw = y2.shape
    vec = pl.BlockSpec((1, cpw), lambda i: (0, 0))
    blk = pl.BlockSpec((rows, cpw), lambda i: (i, 0))
    return pl.pallas_call(
        _bn_add_relu_proj_kernel,
        out_shape=jax.ShapeDtypeStruct((m, cout), jnp.float32),
        grid=(n_imgs,),
        in_specs=[blk, blk, vec, vec, vec, vec],
        out_specs=pl.BlockSpec((rows, cout), lambda i: (i, 0)),
        compiler_params=_cparams("parallel"),
    )(y2, ysc, s2, t2, ssc, tsc)


def _bn_add_relu_id(y2, x_flat, s2, t2, n_imgs, rows, cout):
    m, cpw = y2.shape
    cin = x_flat.shape[1]
    vec = pl.BlockSpec((1, cpw), lambda i: (0, 0))
    return pl.pallas_call(
        _bn_add_relu_id_kernel,
        out_shape=jax.ShapeDtypeStruct((m, cout), jnp.float32),
        grid=(n_imgs,),
        in_specs=[pl.BlockSpec((rows, cpw), lambda i: (i, 0)),
                  pl.BlockSpec((rows, cin), lambda i: (i, 0)),
                  vec, vec],
        out_specs=pl.BlockSpec((rows, cout), lambda i: (i, 0)),
        compiler_params=_cparams("parallel"),
    )(y2, x_flat, s2, t2)


# --------------------------------------------------------------------------
# Glue: 3x3 im2col (JAX, conv1 / fallback only)
# --------------------------------------------------------------------------
def _im2col_3x3(x_nhwc, stride):
    n, h, w, c = x_nhwc.shape
    ho = (h + 2 - 3) // stride + 1
    wo = (w + 2 - 3) // stride + 1
    xp = jnp.pad(x_nhwc, ((0, 0), (1, 1), (1, 1), (0, 0)))
    cols = []
    for kh in range(3):
        for kw in range(3):
            cols.append(xp[:, kh:kh + stride * (ho - 1) + 1:stride,
                           kw:kw + stride * (wo - 1) + 1:stride, :])
    patches = jnp.concatenate(cols, axis=-1)          # [N, Ho, Wo, 9*C]
    return patches.reshape(n * ho * wo, 9 * c), (n, ho, wo)


# --------------------------------------------------------------------------
# ResidualBlock forward (Pallas)
# --------------------------------------------------------------------------
def residual_block_forward(x_nchw, params, stride, *, compute_dtype=jnp.bfloat16):
    x = jnp.transpose(x_nchw, (0, 2, 3, 1)).astype(jnp.float32)   # NCHW -> NHWC
    # TODO(synk): an NHWC-native caller could drop both boundary transposes.
    n, h, w, cin = x.shape
    cout = params["w1"].shape[-1]
    cp = _round_up(cout, 128)            # lane-dense channel padding
    has_proj = "wsc" in params

    # ---- conv1 (3x3, stride s) [+ folded 1x1 projection shortcut] ----------
    p1, (n, ho, wo) = _im2col_3x3(x.astype(compute_dtype), stride)
    rows = ho * wo
    m = n * rows

    w1f = jnp.pad(params["w1"], ((0, 0), (0, 0), (0, 0), (0, cp - cout)))
    w1f = w1f.reshape(9 * cin, cp)
    if has_proj:
        wsc = jnp.pad(params["wsc"], ((0, 0), (0, cp - cout)))        # [cin, cp]
        wcat = jnp.zeros((9 * cin, 2 * cp), jnp.float32)
        wcat = wcat.at[:, :cp].set(w1f)
        # 1x1 stride-s shortcut input == centre tap (kh=kw=1) of the 3x3 im2col
        wcat = wcat.at[4 * cin:5 * cin, cp:].set(wsc)
    else:
        wcat = w1f
    n_y = 2 if has_proj else 1
    ys, mean_c, rstd_c = _matmul_stats(p1, wcat.astype(compute_dtype),
                                       n, rows, n_y, compute_dtype)
    y1 = ys[0]

    # bn1 folded into per-channel scale/shift (applied inside the conv2 kernel)
    g1 = jnp.pad(params["g1"], (0, cp - cout))
    b1 = jnp.pad(params["b1"], (0, cp - cout))
    scale1 = (rstd_c[:cp] * g1)[None, :]
    shift1 = (b1 - mean_c[:cp] * rstd_c[:cp] * g1)[None, :]

    # ---- conv2 (3x3, stride 1): in-kernel halo conv fused with bn1+ReLU ----
    w2p = jnp.pad(params["w2"],
                  ((0, 0), (0, 0), (0, cp - cout), (0, cp - cout)))
    w2p = w2p.astype(compute_dtype)
    y2 = None
    if wo % 8 == 0:    # in-kernel [Ho,Wo,C]->[Ho*Wo,C] reshape needs Wo % 8 == 0
        hp, wp = ho + 2, wo + 2
        y1p = jnp.pad(y1.reshape(n, ho, wo, cp),
                      ((0, 0), (1, 1), (1, 1), (0, 0)))
        border = jnp.pad(jnp.ones((ho, wo, 1), jnp.float32),
                         ((1, 1), (1, 1), (0, 0)))
        try:
            y2, mean2, rstd2 = _conv2_halo(y1p, w2p.reshape(9, cp, cp),
                                           scale1, shift1, border,
                                           n, ho, wo, compute_dtype)
            jax.block_until_ready(y2)
        except Exception:
            y2 = None
    if y2 is None:
        # TODO(synk): halo-conv path unavailable for this shape on this chip;
        # fall back to separate bn1+ReLU sweep + JAX im2col + patch matmul.
        h_act = _bn_relu(y1, scale1, shift1, n, rows, compute_dtype)
        p2, _ = _im2col_3x3(h_act.reshape(n, ho, wo, cp), 1)
        (y2,), mean2, rstd2 = _matmul_stats(p2, w2p.reshape(9 * cp, cp),
                                            n, rows, 1, compute_dtype)

    g2 = jnp.pad(params["g2"], (0, cp - cout))
    b2 = jnp.pad(params["b2"], (0, cp - cout))
    scale2 = (rstd2 * g2)[None, :]
    shift2 = (b2 - mean2 * rstd2 * g2)[None, :]

    # ---- bn2 + shortcut + ReLU (writes the true cout channels directly) ----
    if has_proj:
        ysc = ys[1]
        gsc = jnp.pad(params["gsc"], (0, cp - cout))
        bsc = jnp.pad(params["bsc"], (0, cp - cout))
        scale_sc = (rstd_c[cp:] * gsc)[None, :]
        shift_sc = (bsc - mean_c[cp:] * rstd_c[cp:] * gsc)[None, :]
        out = _bn_add_relu_proj(y2, ysc, scale2, shift2, scale_sc, shift_sc,
                                n, rows, cout)
    else:
        x_flat = x.reshape(m, cin)         # identity: stride==1, cin==cout
        out = _bn_add_relu_id(y2, x_flat, scale2, shift2, n, rows, cout)

    out = out.reshape(n, ho, wo, cout)
    return jnp.transpose(out, (0, 3, 1, 2))                      # -> NCHW


# --------------------------------------------------------------------------
# Pure-JAX reference (same operand precision as the kernel path)
# --------------------------------------------------------------------------
def residual_block_reference(x_nchw, params, stride, compute_dtype=jnp.bfloat16):
    x = jnp.transpose(x_nchw, (0, 2, 3, 1)).astype(jnp.float32)
    dn = ("NHWC", "HWIO", "NHWC")

    def conv(v, wt, s, pad):
        return jax.lax.conv_general_dilated(
            v.astype(compute_dtype), wt.astype(compute_dtype), (s, s), pad,
            dimension_numbers=dn, preferred_element_type=jnp.float32)

    def bn(y, g, b):
        mu = y.mean(axis=(0, 1, 2), keepdims=True)
        var = jnp.square(y - mu).mean(axis=(0, 1, 2), keepdims=True)
        return (y - mu) / jnp.sqrt(var + EPS) * g + b

    y = conv(x, params["w1"], stride, [(1, 1), (1, 1)])
    y = jnp.maximum(bn(y, params["g1"], params["b1"]), 0.0)
    y = conv(y, params["w2"], 1, [(1, 1), (1, 1)])
    y = bn(y, params["g2"], params["b2"])
    if "wsc" in params:
        wsc = params["wsc"].reshape(1, 1, *params["wsc"].shape)
        sc = bn(conv(x, wsc, stride, [(0, 0), (0, 0)]),
                params["gsc"], params["bsc"])
    else:
        sc = x
    return jnp.transpose(jnp.maximum(y + sc, 0.0), (0, 3, 1, 2))


# --------------------------------------------------------------------------
# Deterministic parameter init
# --------------------------------------------------------------------------
def init_params(key, cin, cout, stride):
    ks = jax.random.split(key, 10)
    p = {
        "w1": 0.1 * jax.random.normal(ks[0], (3, 3, cin, cout), jnp.float32),
        "g1": 1.0 + 0.1 * jax.random.normal(ks[1], (cout,), jnp.float32),
        "b1": 0.1 * jax.random.normal(ks[2], (cout,), jnp.float32),
        "w2": 0.1 * jax.random.normal(ks[3], (3, 3, cout, cout), jnp.float32),
        "g2": 1.0 + 0.1 * jax.random.normal(ks[4], (cout,), jnp.float32),
        "b2": 0.1 * jax.random.normal(ks[5], (cout,), jnp.float32),
    }
    if stride != 1 or cin != cout:
        p["wsc"] = 0.1 * jax.random.normal(ks[6], (cin, cout), jnp.float32)
        p["gsc"] = 1.0 + 0.1 * jax.random.normal(ks[7], (cout,), jnp.float32)
        p["bsc"] = 0.1 * jax.random.normal(ks[8], (cout,), jnp.float32)
    return p


if __name__ == "__main__":
    key = jax.random.PRNGKey(0)
    kx, kp1, kp2, kp3 = jax.random.split(key, 4)
    x = jax.random.normal(kx, (2, 4, 16, 16), jnp.float32)   # NCHW

    # Case 1: projection shortcut (cin != cout), stride=1, f32 operands.
    params = init_params(kp1, cin=4, cout=8, stride=1)
    out = jax.block_until_ready(
        residual_block_forward(x, params, 1, compute_dtype=jnp.float32))
    ref = residual_block_reference(x, params, 1, compute_dtype=jnp.float32)
    assert out.shape == (2, 8, 16, 16)
    assert jnp.allclose(out, ref, rtol=1e-3, atol=1e-3), "proj/f32 mismatch"

    # Case 2: identity shortcut (cin == cout, stride=1), bf16 MXU operands.
    params_id = init_params(kp2, cin=4, cout=4, stride=1)
    out_id = jax.block_until_ready(residual_block_forward(x, params_id, 1))
    ref_id = residual_block_reference(x, params_id, 1)
    assert out_id.shape == (2, 4, 16, 16)
    assert jnp.allclose(out_id, ref_id, rtol=2e-2, atol=2e-2), "identity/bf16 mismatch"

    # Case 3: projection shortcut with stride=2, bf16 MXU operands.
    params_s2 = init_params(kp3, cin=4, cout=8, stride=2)
    out_s2 = jax.block_until_ready(residual_block_forward(x, params_s2, 2))
    ref_s2 = residual_block_reference(x, params_s2, 2)
    assert out_s2.shape == (2, 8, 8, 8)
    assert jnp.allclose(out_s2, ref_s2, rtol=2e-2, atol=2e-2), "proj/stride2/bf16 mismatch"

    print("KERNEL_OK")
</pallas_src>

<mosaic_0001>
module attributes {stable_mosaic.version = 11 : i64} {
  func.func @_matmul_stats_kernel(%arg0: i32, %arg1: i32, %arg2: memref<256x36xf32, #tpu.memory_space<vmem>>, %arg3: memref<36x256xf32, #tpu.memory_space<vmem>>, %arg4: memref<256x128xf32, #tpu.memory_space<vmem>>, %arg5: memref<256x128xf32, #tpu.memory_space<vmem>>, %arg6: memref<1x1x256xf32, #tpu.memory_space<vmem>>, %arg7: memref<1x1x256xf32, #tpu.memory_space<vmem>>) attributes {dimension_semantics = [#tpu.dimension_semantics<parallel>, #tpu.dimension_semantics<arbitrary>], iteration_bounds = array<i64: 2, 1>, scalar_prefetch = 0 : i64, scratch_operands = 0 : i64, tpu.core_type = #tpu.core_type<tc>, window_params = [{transform_indices = @transform_0, window_bounds = array<i64: 256, 36>}, {pipeline_mode = #tpu.pipeline_mode<synchronous>, transform_indices = @transform_1, window_bounds = array<i64: 36, 256>}, {transform_indices = @transform_2, window_bounds = array<i64: 256, 128>}, {transform_indices = @transform_3, window_bounds = array<i64: 256, 128>}, {transform_indices = @transform_4, window_bounds = array<i64: 1, 1, 256>}, {transform_indices = @transform_5, window_bounds = array<i64: 1, 1, 256>}]} {
    %c0 = arith.constant 0 : index
    %c0_0 = arith.constant 0 : index
    %0 = vector.load %arg2[%c0, %c0_0] : memref<256x36xf32, #tpu.memory_space<vmem>>, vector<256x36xf32>
    %c0_1 = arith.constant 0 : index
    %c0_2 = arith.constant 0 : index
    %1 = vector.load %arg3[%c0_1, %c0_2] : memref<36x256xf32, #tpu.memory_space<vmem>>, vector<36x256xf32>
    %cst = arith.constant dense<0.000000e+00> : vector<256x256xf32>
    %2 = tpu.matmul %0, %1, %cst {dimension_numbers = #tpu.dot_dimension_numbers<[1], [0], [0], [1], [0, 0, 1, 1], [], []>} : vector<256x36xf32>, vector<36x256xf32>, vector<256x256xf32> -> vector<256x256xf32>
    %3 = vector.extract_strided_slice %2 {offsets = [0, 0], sizes = [256, 128], strides = [1, 1]} : vector<256x256xf32> to vector<256x128xf32>
    %c0_3 = arith.constant 0 : index
    %c0_4 = arith.constant 0 : index
    %4 = vector.load %arg4[%c0_3, %c0_4] : memref<256x128xf32, #tpu.memory_space<vmem>>, vector<256x128xf32>
    tpu.vector_store %arg4[%c0_3, %c0_4], %3 {strides = array<i32>} : memref<256x128xf32, #tpu.memory_space<vmem>>, vector<256x128xf32>,
    %5 = vector.extract_strided_slice %2 {offsets = [0, 128], sizes = [256, 128], strides = [1, 1]} : vector<256x256xf32> to vector<256x128xf32>
    %c0_5 = arith.constant 0 : index
    %c0_6 = arith.constant 0 : index
    %6 = vector.load %arg5[%c0_5, %c0_6] : memref<256x128xf32, #tpu.memory_space<vmem>>, vector<256x128xf32>
    tpu.vector_store %arg5[%c0_5, %c0_6], %5 {strides = array<i32>} : memref<256x128xf32, #tpu.memory_space<vmem>>, vector<256x128xf32>,
    %c0_i32 = arith.constant 0 : i32
    %7 = arith.cmpi eq, %arg1, %c0_i32 : i32
    %8 = arith.extui %7 : i1 to i32
    %c0_i32_7 = arith.constant 0 : i32
    %9 = arith.cmpi ne, %8, %c0_i32_7 : i32
    scf.if %9 {
      %cst_22 = arith.constant 0.000000e+00 : f32
      %23 = vector.broadcast %cst_22 : f32 to vector<1x1x256xf32>
      %c0_23 = arith.constant 0 : index
      %c0_24 = arith.constant 0 : index
      %c0_25 = arith.constant 0 : index
      %24 = vector.load %arg6[%c0_23, %c0_24, %c0_25] : memref<1x1x256xf32, #tpu.memory_space<vmem>>, vector<1x1x256xf32>
      tpu.vector_store %arg6[%c0_23, %c0_24, %c0_25], %23 {strides = array<i32>} : memref<1x1x256xf32, #tpu.memory_space<vmem>>, vector<1x1x256xf32>,
      %cst_26 = arith.constant 0.000000e+00 : f32
      %25 = vector.broadcast %cst_26 : f32 to vector<1x1x256xf32>
      %c0_27 = arith.constant 0 : index
      %c0_28 = arith.constant 0 : index
      %c0_29 = arith.constant 0 : index
      %26 = vector.load %arg7[%c0_27, %c0_28, %c0_29] : memref<1x1x256xf32, #tpu.memory_space<vmem>>, vector<1x1x256xf32>
      tpu.vector_store %arg7[%c0_27, %c0_28, %c0_29], %25 {strides = array<i32>} : memref<1x1x256xf32, #tpu.memory_space<vmem>>, vector<1x1x256xf32>,
    } else {
    }
    %c0_8 = arith.constant 0 : index
    %c0_9 = arith.constant 0 : index
    %c0_10 = arith.constant 0 : index
    %10 = vector.load %arg6[%c0_8, %c0_9, %c0_10] : memref<1x1x256xf32, #tpu.memory_space<vmem>>, vector<1x1x256xf32>
    %cst_11 = arith.constant dense<0.000000e+00> : vector<256xf32>
    %11 = vector.multi_reduction <add>, %2, %cst_11 [0] : vector<256x256xf32> to vector<256xf32>
    %12 = vector.shape_cast %11 : vector<256xf32> to vector<1x256xf32>
    %13 = vector.shape_cast %12 : vector<1x256xf32> to vector<1x1x256xf32>
    %14 = arith.addf %10, %13 : vector<1x1x256xf32>
    %c0_12 = arith.constant 0 : index
    %c0_13 = arith.constant 0 : index
    %c0_14 = arith.constant 0 : index
    %15 = vector.load %arg6[%c0_12, %c0_13, %c0_14] : memref<1x1x256xf32, #tpu.memory_space<vmem>>, vector<1x1x256xf32>
    tpu.vector_store %arg6[%c0_12, %c0_13, %c0_14], %14 {strides = array<i32>} : memref<1x1x256xf32, #tpu.memory_space<vmem>>, vector<1x1x256xf32>,
    %c0_15 = arith.constant 0 : index
    %c0_16 = arith.constant 0 : index
    %c0_17 = arith.constant 0 : index
    %16 = vector.load %arg7[%c0_15, %c0_16, %c0_17] : memref<1x1x256xf32, #tpu.memory_space<vmem>>, vector<1x1x256xf32>
    %17 = arith.mulf %2, %2 : vector<256x256xf32>
    %cst_18 = arith.constant dense<0.000000e+00> : vector<256xf32>
    %18 = vector.multi_reduction <add>, %17, %cst_18 [0] : vector<256x256xf32> to vector<256xf32>
    %19 = vector.shape_cast %18 : vector<256xf32> to vector<1x256xf32>
    %20 = vector.shape_cast %19 : vector<1x256xf32> to vector<1x1x256xf32>
    %21 = arith.addf %16, %20 : vector<1x1x256xf32>
    %c0_19 = arith.constant 0 : index
    %c0_20 = arith.constant 0 : index
    %c0_21 = arith.constant 0 : index
    %22 = vector.load %arg7[%c0_19, %c0_20, %c0_21] : memref<1x1x256xf32, #tpu.memory_space<vmem>>, vector<1x1x256xf32>
    tpu.vector_store %arg7[%c0_19, %c0_20, %c0_21], %21 {strides = array<i32>} : memref<1x1x256xf32, #tpu.memory_space<vmem>>, vector<1x1x256xf32>,
    return
  }
  func.func @transform_0(%arg0: i32, %arg1: i32) -> (i32, i32) {
    %c1_i32 = arith.constant 1 : i32
    %0 = arith.muli %arg0, %c1_i32 : i32
    %1 = arith.addi %0, %arg1 : i32
    %c0_i32 = arith.constant 0 : i32
    %c0_i32_0 = arith.constant 0 : i32
    return %1, %c0_i32 : i32, i32
  }
  func.func @transform_1(%arg0: i32, %arg1: i32) -> (i32, i32) {
    %c0_i32 = arith.constant 0 : i32
    %c0_i32_0 = arith.constant 0 : i32
    %c0_i32_1 = arith.constant 0 : i32
    return %c0_i32, %c0_i32_0 : i32, i32
  }
  func.func @transform_2(%arg0: i32, %arg1: i32) -> (i32, i32) {
    %c1_i32 = arith.constant 1 : i32
    %0 = arith.muli %arg0, %c1_i32 : i32
    %1 = arith.addi %0, %arg1 : i32
    %c0_i32 = arith.constant 0 : i32
    %c0_i32_0 = arith.constant 0 : i32
    return %1, %c0_i32 : i32, i32
  }
  func.func @transform_3(%arg0: i32, %arg1: i32) -> (i32, i32) {
    %c1_i32 = arith.constant 1 : i32
    %0 = arith.muli %arg0, %c1_i32 : i32
    %1 = arith.addi %0, %arg1 : i32
    %c0_i32 = arith.constant 0 : i32
    %c0_i32_0 = arith.constant 0 : i32
    return %1, %c0_i32 : i32, i32
  }
  func.func @transform_4(%arg0: i32, %arg1: i32) -> (i32, i32, i32) {
    %c0_i32 = arith.constant 0 : i32
    %c0_i32_0 = arith.constant 0 : i32
    %c0_i32_1 = arith.constant 0 : i32
    return %arg0, %c0_i32, %c0_i32_0 : i32, i32, i32
  }
  func.func @transform_5(%arg0: i32, %arg1: i32) -> (i32, i32, i32) {
    %c0_i32 = arith.constant 0 : i32
    %c0_i32_0 = arith.constant 0 : i32
    %c0_i32_1 = arith.constant 0 : i32
    return %arg0, %c0_i32, %c0_i32_0 : i32, i32, i32
  }
}

</mosaic_0001>

<llo_original>
// kernel: tpu_custom_call.1
$region0: #{tpu_custom_call.1}
  #allocation0 [shape = 'u32[]', space=smem, size = 0x4, offset = 0x4, fixed_abs, tag = 'smem constant byte address 0x4 - core index']
  #allocation1 [shape = 'u32[72,128]{1,0:T(1,128)}', space=vmem, size = 0x9000, scoped, tag = 'internal scratch']
  %s0 = inlined_call_operand.vmem [shape: f32[512,36], index: 0, kind: input, shape index: {}]
  %s1 = inlined_call_operand.vmem [shape: f32[36,256], index: 1, kind: input, shape index: {}]
  %s2 = inlined_call_operand.hbm [shape: f32[512,128], index: 2, kind: output, shape index: {0}]
  %s3 = inlined_call_operand.hbm [shape: f32[512,128], index: 3, kind: output, shape index: {1}]
  %s4 = inlined_call_operand.hbm [shape: f32[2,1,256], index: 4, kind: output, shape index: {2}]
  %s5 = inlined_call_operand.hbm [shape: f32[2,1,256], index: 5, kind: output, shape index: {3}]
  %6 = xla_tuple %s2, %s3, %s4, %s5
  %s7 = sld [smem:[#allocation0]]
  $region69: #{tpu_custom_call.1} parent=0
    _
  %s9 = ssub.s32 1, %s7
  %s10 = scalar_select 0, %s9, %s7
  $region1: #{tpu_custom_call.1} parent=0
    #allocation2 [shape = 'u8[262144]{0}', space=vmem, size = 0x40000, scoped, tag = 'output window, operand 0']
    #allocation3 [shape = 's32[2]{0}', space=sflag, size = 0x8, scoped, tag = 'scoped memory for tpu_custom_call.1']
    #allocation4 [shape = 'u8[262144]{0}', space=vmem, size = 0x40000, scoped, tag = 'output window, operand 1']
    #allocation5 [shape = 's32[2]{0}', space=sflag, size = 0x8, scoped, tag = 'scoped memory for tpu_custom_call.1']
    #allocation6 [shape = 'u8[2048]{0}', space=vmem, size = 0x800, scoped, tag = 'output window, operand 2']
    #allocation7 [shape = 'u8[2048]{0}', space=vmem, size = 0x800, scoped, tag = 'output window, operand 3']
    #allocation8 [shape = 's32[2]{0}', space=sflag, size = 0x8, scoped, tag = 'scoped memory for tpu_custom_call.1']
    %11 = vsyncpa [#allocation3], 0
    %s12 = scalar_lea.sflag [#allocation3], 1
    %13 = vsyncpa %s12, 0
    %14 = vsyncpa [#allocation5], 0
    %s15 = scalar_lea.sflag [#allocation5], 1
    %16 = vsyncpa %s15, 0
    %17 = vsyncpa [#allocation8], 0
    %s18 = scalar_lea.sflag [#allocation8], 1
    %19 = vsyncpa %s18, 0
    loop: start=0, step=1, limit=4
    $region2: #{tpu_custom_call.1} parent=1 // loop_pre_header
      _
    $region3: #{tpu_custom_call.1} parent=1 // loop_header
      %s21 = sphi 0, %s25
      %p22 = scmp.ge.s32.totalorder %s21, 4
      %s28 = sphi 0, %s40
      %s29 = sphi 0, %s36
      %s30 = sphi 0, %s28
      %s31 = sphi 0, %s29
      %s32 = sphi 0, %s30
      %s33 = sphi 0, %s31
      %s45 = sphi 0, %s47
      %s48 = sphi 0, %s45
      %s49 = sphi 0, %s48
      %s65 = sphi 0, %s49
      %s69 = sphi 0, %s69
      %s71 = sphi 0, %s69
      %s72 = sphi 0, %s71
      %s86 = sphi 0, %s72
      %s94 = sphi 0, %s96
      %s97 = sphi 0, %s94
      %s98 = sphi 0, %s97
      %s114 = sphi 0, %s98
      %s122 = sphi 0, %s124
      %s125 = sphi 0, %s122
      %s126 = sphi 0, %s125
      %s142 = sphi 0, %s126
      %s148 = sphi 0, %s150
      %s151 = sphi 0, %s148
      %s152 = sphi 0, %s151
      %s168 = sphi 0, %s152
      %s174 = sphi 0, %s176
      %s177 = sphi 0, %s174
      %s178 = sphi 0, %s177
      %s194 = sphi 0, %s178
    $region4: #{tpu_custom_call.1} parent=1 // loop_header_branch
      %24 = sbr.rel (%p22) target = $region8
    $region5: #{tpu_custom_call.1} parent=1 // loop_body
      %s26 = ssub.s32 %s21, 1
      %s27 = ssub.s32 %s21, 2
      %s34 = sadd.s32 1, %s29
      %p35 = scmp.ge.s32.totalorder %s34, 1
      %s36 = scalar_select %p35, 0, %s34
      %s37 = sadd.s32 1, %s28
      %s38 = scalar_select %p35, %s37, %s28
      %p39 = scmp.ge.s32.totalorder %s38, 2
      %s40 = scalar_select %p39, 0, %s38
      %s41 = sadd.s32 %s28, %s29
      %s42 = sadd.s32 %s40, %s36
      %s43 = ssub.s32 %s41, %s42
      %p44 = scmp.eq.s32.totalorder %s43, 0
      %s46 = sadd.s32 %s45, 1
      %s47 = scalar_select %p44, %s45, %s46
      %p50 = pneg %p44
      %p51 = scmp.eq.s32.totalorder %s21, 1
      %p52 = por %p50, %p51
      %p53 = scmp.ne.s32.totalorder %s45, %s48
      %p54 = scmp.eq.s32.totalorder %s21, 0
      %p55 = por %p53, %p54
      %p56 = scmp.ne.s32.totalorder %s45, %s48
      %p57 = scmp.eq.s32.totalorder %s26, 1
      %p58 = por %p56, %p57
      %p59 = scmp.ne.s32.totalorder %s48, %s49
      %p60 = scmp.eq.s32.totalorder %s26, 0
      %p61 = por %p59, %p60
      %p62 = scmp.ne.s32.totalorder %s48, %s49
      %p63 = scmp.eq.s32.totalorder %s27, 1
      %p64 = por %p62, %p63
      %p66 = scmp.ne.s32.totalorder %s49, %s65
      %p67 = scmp.eq.s32.totalorder %s27, 0
      %p68 = por %p66, %p67
      %s70 = sadd.s32 %s69, 1
      %p73 = scmp.eq.s32.totalorder %s21, 1
      %p74 = scmp.ne.s32.totalorder %s69, %s71
      %p75 = scmp.eq.s32.totalorder %s21, 0
      %p76 = por %p74, %p75
      %p77 = scmp.ne.s32.totalorder %s69, %s71
      %p78 = scmp.eq.s32.totalorder %s26, 1
      %p79 = por %p77, %p78
      %p80 = scmp.ne.s32.totalorder %s71, %s72
      %p81 = scmp.eq.s32.totalorder %s26, 0
      %p82 = por %p80, %p81
      %p83 = scmp.ne.s32.totalorder %s71, %s72
      %p84 = scmp.eq.s32.totalorder %s27, 1
      %p85 = por %p83, %p84
      %p87 = scmp.ne.s32.totalorder %s72, %s86
      %p88 = scmp.eq.s32.totalorder %s27, 0
      %p89 = por %p87, %p88
      %s90 = sadd.s32 %s28, %s29
      %s91 = sadd.s32 %s40, %s36
      %s92 = ssub.s32 %s90, %s91
      %p93 = scmp.eq.s32.totalorder %s92, 0
      %s95 = sadd.s32 %s94, 1
      %s96 = scalar_select %p93, %s94, %s95
      %p99 = pneg %p93
      %p100 = scmp.eq.s32.totalorder %s21, 1
      %p101 = por %p99, %p100
      %p102 = scmp.ne.s32.totalorder %s94, %s97
      %p103 = scmp.eq.s32.totalorder %s21, 0
      %p104 = por %p102, %p103
      %p105 = scmp.ne.s32.totalorder %s94, %s97
      %p106 = scmp.eq.s32.totalorder %s26, 1
      %p107 = por %p105, %p106
      %p108 = scmp.ne.s32.totalorder %s97, %s98
      %p109 = scmp.eq.s32.totalorder %s26, 0
      %p110 = por %p108, %p109
      %p111 = scmp.ne.s32.totalorder %s97, %s98
      %p112 = scmp.eq.s32.totalorder %s27, 1
      %p113 = por %p111, %p112
      %p115 = scmp.ne.s32.totalorder %s98, %s114
      %p116 = scmp.eq.s32.totalorder %s27, 0
      %p117 = por %p115, %p116
      %s118 = sadd.s32 %s28, %s29
      %s119 = sadd.s32 %s40, %s36
      %s120 = ssub.s32 %s118, %s119
      %p121 = scmp.eq.s32.totalorder %s120, 0
      %s123 = sadd.s32 %s122, 1
      %s124 = scalar_select %p121, %s122, %s123
      %p127 = pneg %p121
      %p128 = scmp.eq.s32.totalorder %s21, 1
      %p129 = por %p127, %p128
      %p130 = scmp.ne.s32.totalorder %s122, %s125
      %p131 = scmp.eq.s32.totalorder %s21, 0
      %p132 = por %p130, %p131
      %p133 = scmp.ne.s32.totalorder %s122, %s125
      %p134 = scmp.eq.s32.totalorder %s26, 1
      %p135 = por %p133, %p134
      %p136 = scmp.ne.s32.totalorder %s125, %s126
      %p137 = scmp.eq.s32.totalorder %s26, 0
      %p138 = por %p136, %p137
      %p139 = scmp.ne.s32.totalorder %s125, %s126
      %p140 = scmp.eq.s32.totalorder %s27, 1
      %p141 = por %p139, %p140
      %p143 = scmp.ne.s32.totalorder %s126, %s142
      %p144 = scmp.eq.s32.totalorder %s27, 0
      %p145 = por %p143, %p144
      %s146 = ssub.s32 %s28, %s40
      %p147 = scmp.eq.s32.totalorder %s146, 0
      %s149 = sadd.s32 %s148, 1
      %s150 = scalar_select %p147, %s148, %s149
      %p153 = pneg %p147
      %p154 = scmp.eq.s32.totalorder %s21, 1
      %p155 = por %p153, %p154
      %p156 = scmp.ne.s32.totalorder %s148, %s151
      %p157 = scmp.eq.s32.totalorder %s21, 0
      %p158 = por %p156, %p157
      %p159 = scmp.ne.s32.totalorder %s148, %s151
      %p160 = scmp.eq.s32.totalorder %s26, 1
      %p161 = por %p159, %p160
      %p162 = scmp.ne.s32.totalorder %s151, %s152
      %p163 = scmp.eq.s32.totalorder %s26, 0
      %p164 = por %p162, %p163
      %p165 = scmp.ne.s32.totalorder %s151, %s152
      %p166 = scmp.eq.s32.totalorder %s27, 1
      %p167 = por %p165, %p166
      %p169 = scmp.ne.s32.totalorder %s152, %s168
      %p170 = scmp.eq.s32.totalorder %s27, 0
      %p171 = por %p169, %p170
      %s172 = ssub.s32 %s28, %s40
      %p173 = scmp.eq.s32.totalorder %s172, 0
      %s175 = sadd.s32 %s174, 1
      %s176 = scalar_select %p173, %s174, %s175
      %p179 = pneg %p173
      %p180 = scmp.eq.s32.totalorder %s21, 1
      %p181 = por %p179, %p180
      %p182 = scmp.ne.s32.totalorder %s174, %s177
      %p183 = scmp.eq.s32.totalorder %s21, 0
      %p184 = por %p182, %p183
      %p185 = scmp.ne.s32.totalorder %s174, %s177
      %p186 = scmp.eq.s32.totalorder %s26, 1
      %p187 = por %p185, %p186
      %p188 = scmp.ne.s32.totalorder %s177, %s178
      %p189 = scmp.eq.s32.totalorder %s26, 0
      %p190 = por %p188, %p189
      %p191 = scmp.ne.s32.totalorder %s177, %s178
      %p192 = scmp.eq.s32.totalorder %s27, 1
      %p193 = por %p191, %p192
      %p195 = scmp.ne.s32.totalorder %s178, %s194
      %p196 = scmp.eq.s32.totalorder %s27, 0
      %p197 = por %p195, %p196
      %p198 = scmp.le.s32.totalorder 1, %s21
      %p199 = scmp.lt.s32.totalorder %s21, 3
      %p200 = pnand %p198, %p199
      %p201 = pneg %p200
      // Predicated region
      $region9: #{tpu_custom_call.1} parent=5 // pred_check
        _
      $region10: #{tpu_custom_call.1} parent=5 // pred_check_branch
        %203 = sbr.rel (%p200) target = $region12
      $region11: #{tpu_custom_call.1} parent=5 // pred_region
        %s204 = ssub.s32 %s21, 1
        // Predicated region
        $region13: #{tpu_custom_call.1} parent=11 // pred_check
          %p205 = pneg %p82
        $region14: #{tpu_custom_call.1} parent=11 // pred_check_branch
          %207 = sbr.rel (%p205) target = $region16
        $region15: #{tpu_custom_call.1} parent=11 // pred_region
          _
        $region16: #{tpu_custom_call.1} parent=11 // pred_fallthru
          _
      $region12: #{tpu_custom_call.1} parent=5 // pred_fallthru
        _
      %p208 = scmp.lt.s32.totalorder %s21, 2
      // Predicated region
      $region17: #{tpu_custom_call.1} parent=5 // pred_check
        %p209 = pneg %p208
      $region18: #{tpu_custom_call.1} parent=5 // pred_check_branch
        %211 = sbr.rel (%p209) target = $region20
      $region19: #{tpu_custom_call.1} parent=5 // pred_region
        // Predicated region
        $region21: #{tpu_custom_call.1} parent=19 // pred_check
          %p212 = pneg %p55
        $region22: #{tpu_custom_call.1} parent=19 // pred_check_branch
          %214 = sbr.rel (%p212) target = $region24
        $region23: #{tpu_custom_call.1} parent=19 // pred_region
          %s215 = sadd.s32 %s28, %s29
          %s216 = smul.u32 32, %s215
          %p217 = scmp.lt.s32.totalorder %s216, 63
          %s218 = scalar_select %p217, %s216, 63
          %s219 = smul.addr %s218, 8
          %s220 = scalar_lea.vmem %s0, %s219
          %s221 = sadd.s32 %s28, %s29
          %s222 = smul.u32 32, %s221
        $region24: #{tpu_custom_call.1} parent=19 // pred_fallthru
          _
      $region20: #{tpu_custom_call.1} parent=5 // pred_fallthru
        _
      %p223 = scmp.le.s32.totalorder 1, %s21
      %p224 = scmp.lt.s32.totalorder %s21, 3
      %p225 = pnand %p223, %p224
      %p226 = pneg %p225
      // Predicated region
      $region25: #{tpu_custom_call.1} parent=5 // pred_check
        _
      $region26: #{tpu_custom_call.1} parent=5 // pred_check_branch
        %228 = sbr.rel (%p225) target = $region28
      $region27: #{tpu_custom_call.1} parent=5 // pred_region
        %s229 = ssub.s32 %s21, 1
        %s230 = sadd.s32 %s30, %s31
        %s231 = smul.u32 32, %s230
        %p232 = scmp.lt.s32.totalorder %s231, 63
        %s233 = scalar_select %p232, %s231, 63
        %s234 = smul.addr %s233, 8
        %s235 = scalar_lea.vmem %s0, %s234
        %p236 = pneg %p61
        %p237 = pneg %p58
        %p238 = pneg %p82
        %p239 = pneg %p79
        %p240 = pneg %p110
        %p241 = pneg %p107
        %s242 = sand.u32 %s97, 1
        %s243 = scalar_lea.sflag [#allocation3], %s242
        %s244 = sand.u32 %s97, 1
        %s245 = smul.addr %s244, 256
        %s246 = scalar_lea.vmem [#allocation2], %s245
        %p247 = pneg %p138
        %p248 = pneg %p135
        %s249 = sand.u32 %s26, 1
        %s250 = scalar_lea.sflag [#allocation5], %s249
        %s251 = sand.u32 %s125, 1
        %s252 = smul.addr %s251, 256
        %s253 = scalar_lea.vmem [#allocation4], %s252
        %p254 = pneg %p164
        %p255 = pneg %p161
        %s256 = sand.u32 %s26, 1
        %s257 = scalar_lea.sflag [#allocation5], %s256
        %s258 = sand.u32 %s151, 1
        %s259 = smul.addr %s258, 2
        %s260 = scalar_lea.vmem [#allocation6], %s259
        %p261 = pneg %p190
        %p262 = pneg %p187
        %s263 = sand.u32 %s177, 1
        %s264 = scalar_lea.sflag [#allocation8], %s263
        %s265 = sand.u32 %s177, 1
        %s266 = smul.addr %s265, 2
        %s267 = scalar_lea.vmem [#allocation7], %s266
        %s268 = sadd.s32 %s30, %s31
        %s269 = smul.u32 32, %s268
        %p270 = scmp.lt.s32.totalorder %s269, 63
        %s271 = scalar_select %p270, %s269, 63
        %s272 = smul.addr %s271, 8
        %s273 = scalar_lea.vmem %s0, %s272
        %s274 = sadd.s32 %s30, %s31
        %s275 = smul.u32 32, %s274
        %s276 = sadd.s32 %s30, %s31
        %s277 = smul.u32 32, %s276
        %s278 = sadd.s32 %s30, %s31
        %s279 = smul.u32 32, %s278
        %v280 = vld [vmem:[%s273] sm:$0xff]
        %v281 = vld [vmem:[%s273 + $0x8] sm:$0xff]
        %v282 = vld [vmem:[%s273 + $0x10] sm:$0xff]
        %v283 = vld [vmem:[%s273 + $0x18] sm:$0xff]
        %v284 = vld [vmem:[%s273 + $0x20] sm:$0xff]
        %v285 = vld [vmem:[%s273 + $0x28] sm:$0xff]
        %v286 = vld [vmem:[%s273 + $0x30] sm:$0xff]
        %v287 = vld [vmem:[%s273 + $0x38] sm:$0xff]
        %v288 = vld [vmem:[%s273 + $0x40] sm:$0xff]
        %v289 = vld [vmem:[%s273 + $0x48] sm:$0xff]
        %v290 = vld [vmem:[%s273 + $0x50] sm:$0xff]
        %v291 = vld [vmem:[%s273 + $0x58] sm:$0xff]
        %v292 = vld [vmem:[%s273 + $0x60] sm:$0xff]
        %v293 = vld [vmem:[%s273 + $0x68] sm:$0xff]
        %v294 = vld [vmem:[%s273 + $0x70] sm:$0xff]
        %v295 = vld [vmem:[%s273 + $0x78] sm:$0xff]
        %v296 = vld [vmem:[%s273 + $0x80] sm:$0xff]
        %v297 = vld [vmem:[%s273 + $0x88] sm:$0xff]
        %v298 = vld [vmem:[%s273 + $0x90] sm:$0xff]
        %v299 = vld [vmem:[%s273 + $0x98] sm:$0xff]
        %v300 = vld [vmem:[%s273 + $0xa0] sm:$0xff]
        %v301 = vld [vmem:[%s273 + $0xa8] sm:$0xff]
        %v302 = vld [vmem:[%s273 + $0xb0] sm:$0xff]
        %v303 = vld [vmem:[%s273 + $0xb8] sm:$0xff]
        %v304 = vld [vmem:[%s273 + $0xc0] sm:$0xff]
        %v305 = vld [vmem:[%s273 + $0xc8] sm:$0xff]
        %v306 = vld [vmem:[%s273 + $0xd0] sm:$0xff]
        %v307 = vld [vmem:[%s273 + $0xd8] sm:$0xff]
        %v308 = vld [vmem:[%s273 + $0xe0] sm:$0xff]
        %v309 = vld [vmem:[%s273 + $0xe8] sm:$0xff]
        %v310 = vld [vmem:[%s273 + $0xf0] sm:$0xff]
        %v311 = vld [vmem:[%s273 + $0xf8] sm:$0xff]
        %v312 = vld [vmem:[%s1] sm:$0xff]
        %v313 = vld [vmem:[%s1 + $0x8] sm:$0xff]
        %v314 = vld [vmem:[%s1 + $0x10] sm:$0xff]
        %v315 = vld [vmem:[%s1 + $0x18] sm:$0xff]
        %v316 = vld [vmem:[%s1 + $0x20] sm:$0xff]
        %v317 = vld [vmem:[%s1 + $0x28] sm:$0xff]
        %v318 = vld [vmem:[%s1 + $0x30] sm:$0xff]
        %v319 = vld [vmem:[%s1 + $0x38] sm:$0xff]
        %v320 = vld [vmem:[%s1 + $0x40] sm:$0xf]
        %v321 = vld [vmem:[%s1 + $0x48] sm:$0xf]
        %vm322 = vcmask 293888
        %v324 = vsel %vm322, %v280, 0
        %v327 = vsel %vm322, %v281, 0
        %v330 = vsel %vm322, %v282, 0
        %v333 = vsel %vm322, %v283, 0
        %v336 = vsel %vm322, %v284, 0
        %v339 = vsel %vm322, %v285, 0
        %v342 = vsel %vm322, %v286, 0
        %v345 = vsel %vm322, %v287, 0
        %v348 = vsel %vm322, %v288, 0
        %v351 = vsel %vm322, %v289, 0
        %v354 = vsel %vm322, %v290, 0
        %v357 = vsel %vm322, %v291, 0
        %v360 = vsel %vm322, %v292, 0
        %v363 = vsel %vm322, %v293, 0
        %v366 = vsel %vm322, %v294, 0
        %v369 = vsel %vm322, %v295, 0
        %v372 = vsel %vm322, %v296, 0
        %v375 = vsel %vm322, %v297, 0
        %v378 = vsel %vm322, %v298, 0
        %v381 = vsel %vm322, %v299, 0
        %v384 = vsel %vm322, %v300, 0
        %v387 = vsel %vm322, %v301, 0
        %v390 = vsel %vm322, %v302, 0
        %v393 = vsel %vm322, %v303, 0
        %v396 = vsel %vm322, %v304, 0
        %v399 = vsel %vm322, %v305, 0
        %v402 = vsel %vm322, %v306, 0
        %v405 = vsel %vm322, %v307, 0
        %v408 = vsel %vm322, %v308, 0
        %v411 = vsel %vm322, %v309, 0
        %v414 = vsel %vm322, %v310, 0
        %v417 = vsel %vm322, %v311, 0
        %vm419 = vcmask 1043456
        %v421 = vsel %vm419, %v320, 0
        %v424 = vsel %vm419, %v321, 0
        %426 = vmatpush.msra.mxu0 0.0
        %427 = vmatpush.msra.mxu0 0.0
        %428 = vmatpush.msra.mxu0 0.0
        %429 = vmatpush.msra.mxu0 0.0
        %430 = vmatpush.msra.mxu0 0.0
        %431 = vmatpush.msra.mxu0 0.0
        %432 = vmatpush.msra.mxu0 0.0
        %433 = vmatpush.msra.mxu0 0.0
        %434 = vmatpush.msra.mxu0 0.0
        %435 = vmatpush.msra.mxu0 0.0
        %436 = vmatpush.msra.mxu0 0.0
        %437 = vmatpush.msra.mxu0 %v421
        %438 = vmatpush.msra.mxu0 %v318
        %439 = vmatpush.msra.mxu0 %v316
        %440 = vmatpush.msra.mxu0 %v314
        %441 = vmatpush.msra.mxu0 %v312
        %442 = vmatmul.f32.gmra.mxu0 %v324
        %v443 = vpop.f32.mrf.mxu0
        %v444 = vadd.f32 0.0, %v443
        %445 = vmatmul.f32.gmra.mxu0 %v327
        %v446 = vpop.f32.mrf.mxu0
        %v447 = vadd.f32 0.0, %v446
        %448 = vmatmul.f32.gmra.mxu0 %v330
        %v449 = vpop.f32.mrf.mxu0
        %v450 = vadd.f32 0.0, %v449
        %451 = vmatmul.f32.gmra.mxu0 %v333
        %v452 = vpop.f32.mrf.mxu0
        %v453 = vadd.f32 0.0, %v452
        %454 = vmatmul.f32.gmra.mxu0 %v336
        %v455 = vpop.f32.mrf.mxu0
        %v456 = vadd.f32 0.0, %v455
        %457 = vmatmul.f32.gmra.mxu0 %v339
        %v458 = vpop.f32.mrf.mxu0
        %v459 = vadd.f32 0.0, %v458
        %460 = vmatmul.f32.gmra.mxu0 %v342
        %v461 = vpop.f32.mrf.mxu0
        %v462 = vadd.f32 0.0, %v461
        %463 = vmatmul.f32.gmra.mxu0 %v345
        %v464 = vpop.f32.mrf.mxu0
        %v465 = vadd.f32 0.0, %v464
        %466 = vmatmul.f32.gmra.mxu0 %v348
        %v467 = vpop.f32.mrf.mxu0
        %v468 = vadd.f32 0.0, %v467
        %469 = vmatmul.f32.gmra.mxu0 %v351
        %v470 = vpop.f32.mrf.mxu0
        %v471 = vadd.f32 0.0, %v470
        %472 = vmatmul.f32.gmra.mxu0 %v354
        %v473 = vpop.f32.mrf.mxu0
        %v474 = vadd.f32 0.0, %v473
        %475 = vmatmul.f32.gmra.mxu0 %v357
        %v476 = vpop.f32.mrf.mxu0
        %v477 = vadd.f32 0.0, %v476
        %478 = vmatmul.f32.gmra.mxu0 %v360
        %v479 = vpop.f32.mrf.mxu0
        %v480 = vadd.f32 0.0, %v479
        %481 = vmatmul.f32.gmra.mxu0 %v363
        %v482 = vpop.f32.mrf.mxu0
        %v483 = vadd.f32 0.0, %v482
        %484 = vmatmul.f32.gmra.mxu0 %v366
        %v485 = vpop.f32.mrf.mxu0
        %v486 = vadd.f32 0.0, %v485
        %487 = vmatmul.f32.gmra.mxu0 %v369
        %v488 = vpop.f32.mrf.mxu0
        %v489 = vadd.f32 0.0, %v488
        %490 = vmatmul.f32.gmra.mxu0 %v372
        %v491 = vpop.f32.mrf.mxu0
        %v492 = vadd.f32 0.0, %v491
        %493 = vmatmul.f32.gmra.mxu0 %v375
        %v494 = vpop.f32.mrf.mxu0
        %v495 = vadd.f32 0.0, %v494
        %496 = vmatmul.f32.gmra.mxu0 %v378
        %v497 = vpop.f32.mrf.mxu0
        %v498 = vadd.f32 0.0, %v497
        %499 = vmatmul.f32.gmra.mxu0 %v381
        %v500 = vpop.f32.mrf.mxu0
        %v501 = vadd.f32 0.0, %v500
        %502 = vmatmul.f32.gmra.mxu0 %v384
        %v503 = vpop.f32.mrf.mxu0
        %v504 = vadd.f32 0.0, %v503
        %505 = vmatmul.f32.gmra.mxu0 %v387
        %v506 = vpop.f32.mrf.mxu0
        %v507 = vadd.f32 0.0, %v506
        %508 = vmatmul.f32.gmra.mxu0 %v390
        %v509 = vpop.f32.mrf.mxu0
        %v510 = vadd.f32 0.0, %v509
        %511 = vmatmul.f32.gmra.mxu0 %v393
        %v512 = vpop.f32.mrf.mxu0
        %v513 = vadd.f32 0.0, %v512
        %514 = vmatmul.f32.gmra.mxu0 %v396
        %v515 = vpop.f32.mrf.mxu0
        %v516 = vadd.f32 0.0, %v515
        %517 = vmatmul.f32.gmra.mxu0 %v399
        %v518 = vpop.f32.mrf.mxu0
        %v519 = vadd.f32 0.0, %v518
        %520 = vmatmul.f32.gmra.mxu0 %v402
        %v521 = vpop.f32.mrf.mxu0
        %v522 = vadd.f32 0.0, %v521
        %523 = vmatmul.f32.gmra.mxu0 %v405
        %v524 = vpop.f32.mrf.mxu0
        %v525 = vadd.f32 0.0, %v524
        %526 = vmatmul.f32.gmra.mxu0 %v408
        %v527 = vpop.f32.mrf.mxu0
        %v528 = vadd.f32 0.0, %v527
        %529 = vmatmul.f32.gmra.mxu0 %v411
        %v530 = vpop.f32.mrf.mxu0
        %v531 = vadd.f32 0.0, %v530
        %532 = vmatmul.f32.gmra.mxu0 %v414
        %v533 = vpop.f32.mrf.mxu0
        %v534 = vadd.f32 0.0, %v533
        %535 = vmatmul.f32.gmra.mxu0 %v417
        %v536 = vpop.f32.mrf.mxu0
        %v537 = vadd.f32 0.0, %v536
        %538 = vdwg.mxu0
        %539 = vmatpush.msra.mxu0 0.0
        %540 = vmatpush.msra.mxu0 0.0
        %541 = vmatpush.msra.mxu0 0.0
        %542 = vmatpush.msra.mxu0 0.0
        %543 = vmatpush.msra.mxu0 0.0
        %544 = vmatpush.msra.mxu0 0.0
        %545 = vmatpush.msra.mxu0 0.0
        %546 = vmatpush.msra.mxu0 0.0
        %547 = vmatpush.msra.mxu0 0.0
        %548 = vmatpush.msra.mxu0 0.0
        %549 = vmatpush.msra.mxu0 0.0
        %550 = vmatpush.msra.mxu0 %v424
        %551 = vmatpush.msra.mxu0 %v319
        %552 = vmatpush.msra.mxu0 %v317
        %553 = vmatpush.msra.mxu0 %v315
        %554 = vmatpush.msra.mxu0 %v313
        %555 = vmatmul.f32.gmra.mxu0 %v324
        %v556 = vpop.f32.mrf.mxu0
        %v557 = vadd.f32 0.0, %v556
        %558 = vmatmul.f32.gmra.mxu0 %v327
        %v559 = vpop.f32.mrf.mxu0
        %v560 = vadd.f32 0.0, %v559
        %561 = vmatmul.f32.gmra.mxu0 %v330
        %v562 = vpop.f32.mrf.mxu0
        %v563 = vadd.f32 0.0, %v562
        %564 = vmatmul.f32.gmra.mxu0 %v333
        %v565 = vpop.f32.mrf.mxu0
        %v566 = vadd.f32 0.0, %v565
        %567 = vmatmul.f32.gmra.mxu0 %v336
        %v568 = vpop.f32.mrf.mxu0
        %v569 = vadd.f32 0.0, %v568
        %570 = vmatmul.f32.gmra.mxu0 %v339
        %v571 = vpop.f32.mrf.mxu0
        %v572 = vadd.f32 0.0, %v571
        %573 = vmatmul.f32.gmra.mxu0 %v342
        %v574 = vpop.f32.mrf.mxu0
        %v575 = vadd.f32 0.0, %v574
        %576 = vmatmul.f32.gmra.mxu0 %v345
        %v577 = vpop.f32.mrf.mxu0
        %v578 = vadd.f32 0.0, %v577
        %579 = vmatmul.f32.gmra.mxu0 %v348
        %v580 = vpop.f32.mrf.mxu0
        %v581 = vadd.f32 0.0, %v580
        %582 = vmatmul.f32.gmra.mxu0 %v351
        %v583 = vpop.f32.mrf.mxu0
        %v584 = vadd.f32 0.0, %v583
        %585 = vmatmul.f32.gmra.mxu0 %v354
        %v586 = vpop.f32.mrf.mxu0
        %v587 = vadd.f32 0.0, %v586
        %588 = vmatmul.f32.gmra.mxu0 %v357
        %v589 = vpop.f32.mrf.mxu0
        %v590 = vadd.f32 0.0, %v589
        %591 = vmatmul.f32.gmra.mxu0 %v360
        %v592 = vpop.f32.mrf.mxu0
        %v593 = vadd.f32 0.0, %v592
        %594 = vmatmul.f32.gmra.mxu0 %v363
        %v595 = vpop.f32.mrf.mxu0
        %v596 = vadd.f32 0.0, %v595
        %597 = vmatmul.f32.gmra.mxu0 %v366
        %v598 = vpop.f32.mrf.mxu0
        %v599 = vadd.f32 0.0, %v598
        %600 = vmatmul.f32.gmra.mxu0 %v369
        %v601 = vpop.f32.mrf.mxu0
        %v602 = vadd.f32 0.0, %v601
        %603 = vmatmul.f32.gmra.mxu0 %v372
        %v604 = vpop.f32.mrf.mxu0
        %v605 = vadd.f32 0.0, %v604
        %606 = vmatmul.f32.gmra.mxu0 %v375
        %v607 = vpop.f32.mrf.mxu0
        %v608 = vadd.f32 0.0, %v607
        %609 = vmatmul.f32.gmra.mxu0 %v378
        %v610 = vpop.f32.mrf.mxu0
        %v611 = vadd.f32 0.0, %v610
        %612 = vmatmul.f32.gmra.mxu0 %v381
        %v613 = vpop.f32.mrf.mxu0
        %v614 = vadd.f32 0.0, %v613
        %615 = vmatmul.f32.gmra.mxu0 %v384
        %v616 = vpop.f32.mrf.mxu0
        %v617 = vadd.f32 0.0, %v616
        %618 = vmatmul.f32.gmra.mxu0 %v387
        %v619 = vpop.f32.mrf.mxu0
        %v620 = vadd.f32 0.0, %v619
        %621 = vmatmul.f32.gmra.mxu0 %v390
        %v622 = vpop.f32.mrf.mxu0
        %v623 = vadd.f32 0.0, %v622
        %624 = vmatmul.f32.gmra.mxu0 %v393
        %v625 = vpop.f32.mrf.mxu0
        %v626 = vadd.f32 0.0, %v625
        %627 = vmatmul.f32.gmra.mxu0 %v396
        %v628 = vpop.f32.mrf.mxu0
        %v629 = vadd.f32 0.0, %v628
        %630 = vmatmul.f32.gmra.mxu0 %v399
        %v631 = vpop.f32.mrf.mxu0
        %v632 = vadd.f32 0.0, %v631
        %633 = vmatmul.f32.gmra.mxu0 %v402
        %v634 = vpop.f32.mrf.mxu0
        %v635 = vadd.f32 0.0, %v634
        %636 = vmatmul.f32.gmra.mxu0 %v405
        %v637 = vpop.f32.mrf.mxu0
        %v638 = vadd.f32 0.0, %v637
        %639 = vmatmul.f32.gmra.mxu0 %v408
        %v640 = vpop.f32.mrf.mxu0
        %v641 = vadd.f32 0.0, %v640
        %642 = vmatmul.f32.gmra.mxu0 %v411
        %v643 = vpop.f32.mrf.mxu0
        %v644 = vadd.f32 0.0, %v643
        %645 = vmatmul.f32.gmra.mxu0 %v414
        %v646 = vpop.f32.mrf.mxu0
        %v647 = vadd.f32 0.0, %v646
        %648 = vmatmul.f32.gmra.mxu0 %v417
        %v649 = vpop.f32.mrf.mxu0
        %v650 = vadd.f32 0.0, %v649
        %651 = vdwg.mxu0
        %652 = vst [vmem:[%s246] sm:$0xff] %v444
        %653 = vst [vmem:[%s246 + $0x8] sm:$0xff] %v447
        %654 = vst [vmem:[%s246 + $0x10] sm:$0xff] %v450
        %655 = vst [vmem:[%s246 + $0x18] sm:$0xff] %v453
        %656 = vst [vmem:[%s246 + $0x20] sm:$0xff] %v456
        %657 = vst [vmem:[%s246 + $0x28] sm:$0xff] %v459
        %658 = vst [vmem:[%s246 + $0x30] sm:$0xff] %v462
        %659 = vst [vmem:[%s246 + $0x38] sm:$0xff] %v465
        %660 = vst [vmem:[%s246 + $0x40] sm:$0xff] %v468
        %661 = vst [vmem:[%s246 + $0x48] sm:$0xff] %v471
        %662 = vst [vmem:[%s246 + $0x50] sm:$0xff] %v474
        %663 = vst [vmem:[%s246 + $0x58] sm:$0xff] %v477
        %664 = vst [vmem:[%s246 + $0x60] sm:$0xff] %v480
        %665 = vst [vmem:[%s246 + $0x68] sm:$0xff] %v483
        %666 = vst [vmem:[%s246 + $0x70] sm:$0xff] %v486
        %667 = vst [vmem:[%s246 + $0x78] sm:$0xff] %v489
        %668 = vst [vmem:[%s246 + $0x80] sm:$0xff] %v492
        %669 = vst [vmem:[%s246 + $0x88] sm:$0xff] %v495
        %670 = vst [vmem:[%s246 + $0x90] sm:$0xff] %v498
        %671 = vst [vmem:[%s246 + $0x98] sm:$0xff] %v501
        %672 = vst [vmem:[%s246 + $0xa0] sm:$0xff] %v504
        %673 = vst [vmem:[%s246 + $0xa8] sm:$0xff] %v507
        %674 = vst [vmem:[%s246 + $0xb0] sm:$0xff] %v510
        %675 = vst [vmem:[%s246 + $0xb8] sm:$0xff] %v513
        %676 = vst [vmem:[%s246 + $0xc0] sm:$0xff] %v516
        %677 = vst [vmem:[%s246 + $0xc8] sm:$0xff] %v519
        %678 = vst [vmem:[%s246 + $0xd0] sm:$0xff] %v522
        %679 = vst [vmem:[%s246 + $0xd8] sm:$0xff] %v525
        %680 = vst [vmem:[%s246 + $0xe0] sm:$0xff] %v528
        %681 = vst [vmem:[%s246 + $0xe8] sm:$0xff] %v531
        %682 = vst [vmem:[%s246 + $0xf0] sm:$0xff] %v534
        %683 = vst [vmem:[%s246 + $0xf8] sm:$0xff] %v537
        %684 = vst [vmem:[%s253] sm:$0xff] %v557
        %685 = vst [vmem:[%s253 + $0x8] sm:$0xff] %v560
        %686 = vst [vmem:[%s253 + $0x10] sm:$0xff] %v563
        %687 = vst [vmem:[%s253 + $0x18] sm:$0xff] %v566
        %688 = vst [vmem:[%s253 + $0x20] sm:$0xff] %v569
        %689 = vst [vmem:[%s253 + $0x28] sm:$0xff] %v572
        %690 = vst [vmem:[%s253 + $0x30] sm:$0xff] %v575
        %691 = vst [vmem:[%s253 + $0x38] sm:$0xff] %v578
        %692 = vst [vmem:[%s253 + $0x40] sm:$0xff] %v581
        %693 = vst [vmem:[%s253 + $0x48] sm:$0xff] %v584
        %694 = vst [vmem:[%s253 + $0x50] sm:$0xff] %v587
        %695 = vst [vmem:[%s253 + $0x58] sm:$0xff] %v590
        %696 = vst [vmem:[%s253 + $0x60] sm:$0xff] %v593
        %697 = vst [vmem:[%s253 + $0x68] sm:$0xff] %v596
        %698 = vst [vmem:[%s253 + $0x70] sm:$0xff] %v599
        %699 = vst [vmem:[%s253 + $0x78] sm:$0xff] %v602
        %700 = vst [vmem:[%s253 + $0x80] sm:$0xff] %v605
        %701 = vst [vmem:[%s253 + $0x88] sm:$0xff] %v608
        %702 = vst [vmem:[%s253 + $0x90] sm:$0xff] %v611
        %703 = vst [vmem:[%s253 + $0x98] sm:$0xff] %v614
        %704 = vst [vmem:[%s253 + $0xa0] sm:$0xff] %v617
        %705 = vst [vmem:[%s253 + $0xa8] sm:$0xff] %v620
        %706 = vst [vmem:[%s253 + $0xb0] sm:$0xff] %v623
        %707 = vst [vmem:[%s253 + $0xb8] sm:$0xff] %v626
        %708 = vst [vmem:[%s253 + $0xc0] sm:$0xff] %v629
        %709 = vst [vmem:[%s253 + $0xc8] sm:$0xff] %v632
        %710 = vst [vmem:[%s253 + $0xd0] sm:$0xff] %v635
        %711 = vst [vmem:[%s253 + $0xd8] sm:$0xff] %v638
        %712 = vst [vmem:[%s253 + $0xe0] sm:$0xff] %v641
        %713 = vst [vmem:[%s253 + $0xe8] sm:$0xff] %v644
        %714 = vst [vmem:[%s253 + $0xf0] sm:$0xff] %v647
        %715 = vst [vmem:[%s253 + $0xf8] sm:$0xff] %v650
        %p716 = scmp.eq.s32.totalorder %s31, 0
        // Predicated region
        $region29: #{tpu_custom_call.1} parent=27 // pred_check
          %p717 = pneg %p716
        $region30: #{tpu_custom_call.1} parent=27 // pred_check_branch
          %719 = sbr.rel (%p717) target = $region32
        $region31: #{tpu_custom_call.1} parent=27 // pred_region
          %v720 = vlaneseq
          %vm721 = vcmp.ge.s32.totalorder %v720, 0
          %vm722 = vcmp.lt.s32.totalorder %v720, 256
          %vm723 = vmand %vm721, %vm722
          %724 = vst.msk [vmem:[%s260] sm:$0x3] %vm723, 0.0
          %725 = vst.msk [vmem:[%s267] sm:$0x3] %vm723, 0.0
        $region32: #{tpu_custom_call.1} parent=27 // pred_fallthru
          _
        %v726 = vld [vmem:[%s260] sm:$0x3]
        %v727 = vadd.f32 %v444, %v447
        %v728 = vadd.f32 %v727, %v450
        %v729 = vadd.f32 %v728, %v453
        %v730 = vadd.f32 %v729, %v456
        %v731 = vadd.f32 %v730, %v459
        %v732 = vadd.f32 %v731, %v462
        %v733 = vadd.f32 %v732, %v465
        %v734 = vadd.f32 %v733, %v468
        %v735 = vadd.f32 %v734, %v471
        %v736 = vadd.f32 %v735, %v474
        %v737 = vadd.f32 %v736, %v477
        %v738 = vadd.f32 %v737, %v480
        %v739 = vadd.f32 %v738, %v483
        %v740 = vadd.f32 %v739, %v486
        %v741 = vadd.f32 %v740, %v489
        %v742 = vadd.f32 %v741, %v492
        %v743 = vadd.f32 %v742, %v495
        %v744 = vadd.f32 %v743, %v498
        %v745 = vadd.f32 %v744, %v501
        %v746 = vadd.f32 %v745, %v504
        %v747 = vadd.f32 %v746, %v507
        %v748 = vadd.f32 %v747, %v510
        %v749 = vadd.f32 %v748, %v513
        %v750 = vadd.f32 %v749, %v516
        %v751 = vadd.f32 %v750, %v519
        %v752 = vadd.f32 %v751, %v522
        %v753 = vadd.f32 %v752, %v525
        %v754 = vadd.f32 %v753, %v528
        %v755 = vadd.f32 %v754, %v531
        %v756 = vadd.f32 %v755, %v534
        %v757 = vadd.f32 %v756, %v537
        %v758 = vrot.slane %v757, 4
        %v759 = vadd.f32 %v757, %v758
        %v760 = vrot.slane %v759, 2
        %v761 = vadd.f32 %v759, %v760
        %v762 = vrot.slane %v761, 1
        %v763 = vadd.f32 %v761, %v762
        %v764 = vadd.f32 %v557, %v560
        %v765 = vadd.f32 %v764, %v563
        %v766 = vadd.f32 %v765, %v566
        %v767 = vadd.f32 %v766, %v569
        %v768 = vadd.f32 %v767, %v572
        %v769 = vadd.f32 %v768, %v575
        %v770 = vadd.f32 %v769, %v578
        %v771 = vadd.f32 %v770, %v581
        %v772 = vadd.f32 %v771, %v584
        %v773 = vadd.f32 %v772, %v587
        %v774 = vadd.f32 %v773, %v590
        %v775 = vadd.f32 %v774, %v593
        %v776 = vadd.f32 %v775, %v596
        %v777 = vadd.f32 %v776, %v599
        %v778 = vadd.f32 %v777, %v602
        %v779 = vadd.f32 %v778, %v605
        %v780 = vadd.f32 %v779, %v608
        %v781 = vadd.f32 %v780, %v611
        %v782 = vadd.f32 %v781, %v614
        %v783 = vadd.f32 %v782, %v617
        %v784 = vadd.f32 %v783, %v620
        %v785 = vadd.f32 %v784, %v623
        %v786 = vadd.f32 %v785, %v626
        %v787 = vadd.f32 %v786, %v629
        %v788 = vadd.f32 %v787, %v632
        %v789 = vadd.f32 %v788, %v635
        %v790 = vadd.f32 %v789, %v638
        %v791 = vadd.f32 %v790, %v641
        %v792 = vadd.f32 %v791, %v644
        %v793 = vadd.f32 %v792, %v647
        %v794 = vadd.f32 %v793, %v650
        %v795 = vrot.slane %v794, 4
        %v796 = vadd.f32 %v794, %v795
        %v797 = vrot.slane %v796, 2
        %v798 = vadd.f32 %v796, %v797
        %v799 = vrot.slane %v798, 1
        %v800 = vadd.f32 %v798, %v799
        %v803 = vrot.slane %v800, 7
        %vm804 = vcmask 1040384
        %v805 = vsel %vm804, %v763, %v803
        %v807 = vadd.f32 %v726, %v805
        %v808 = vlaneseq
        %vm809 = vcmp.ge.s32.totalorder %v808, 0
        %vm810 = vcmp.lt.s32.totalorder %v808, 256
        %vm811 = vmand %vm809, %vm810
        %812 = vst.msk [vmem:[%s260] sm:$0x3] %vm811, %v807
        %v813 = vld [vmem:[%s267] sm:$0x3]
        %v814 = vmul.f32 %v444, %v444
        %v815 = vmul.f32 %v557, %v557
        %v816 = vmul.f32 %v447, %v447
        %v817 = vmul.f32 %v560, %v560
        %v818 = vmul.f32 %v450, %v450
        %v819 = vmul.f32 %v563, %v563
        %v820 = vmul.f32 %v453, %v453
        %v821 = vmul.f32 %v566, %v566
        %v822 = vmul.f32 %v456, %v456
        %v823 = vmul.f32 %v569, %v569
        %v824 = vmul.f32 %v459, %v459
        %v825 = vmul.f32 %v572, %v572
        %v826 = vmul.f32 %v462, %v462
        %v827 = vmul.f32 %v575, %v575
        %v828 = vmul.f32 %v465, %v465
        %v829 = vmul.f32 %v578, %v578
        %v830 = vmul.f32 %v468, %v468
        %v831 = vmul.f32 %v581, %v581
        %v832 = vmul.f32 %v471, %v471
        %v833 = vmul.f32 %v584, %v584
        %v834 = vmul.f32 %v474, %v474
        %v835 = vmul.f32 %v587, %v587
        %v836 = vmul.f32 %v477, %v477
        %v837 = vmul.f32 %v590, %v590
        %v838 = vmul.f32 %v480, %v480
        %v839 = vmul.f32 %v593, %v593
        %v840 = vmul.f32 %v483, %v483
        %v841 = vmul.f32 %v596, %v596
        %v842 = vmul.f32 %v486, %v486
        %v843 = vmul.f32 %v599, %v599
        %v844 = vmul.f32 %v489, %v489
        %v845 = vmul.f32 %v602, %v602
        %v846 = vmul.f32 %v492, %v492
        %v847 = vmul.f32 %v605, %v605
        %v848 = vmul.f32 %v495, %v495
        %v849 = vmul.f32 %v608, %v608
        %v850 = vmul.f32 %v498, %v498
        %v851 = vmul.f32 %v611, %v611
        %v852 = vmul.f32 %v501, %v501
        %v853 = vmul.f32 %v614, %v614
        %v854 = vmul.f32 %v504, %v504
        %v855 = vmul.f32 %v617, %v617
        %v856 = vmul.f32 %v507, %v507
        %v857 = vmul.f32 %v620, %v620
        %v858 = vmul.f32 %v510, %v510
        %v859 = vmul.f32 %v623, %v623
        %v860 = vmul.f32 %v513, %v513
        %v861 = vmul.f32 %v626, %v626
        %v862 = vmul.f32 %v516, %v516
        %v863 = vmul.f32 %v629, %v629
        %v864 = vmul.f32 %v519, %v519
        %v865 = vmul.f32 %v632, %v632
        %v866 = vmul.f32 %v522, %v522
        %v867 = vmul.f32 %v635, %v635
        %v868 = vmul.f32 %v525, %v525
        %v869 = vmul.f32 %v638, %v638
        %v870 = vmul.f32 %v528, %v528
        %v871 = vmul.f32 %v641, %v641
        %v872 = vmul.f32 %v531, %v531
        %v873 = vmul.f32 %v644, %v644
        %v874 = vmul.f32 %v534, %v534
        %v875 = vmul.f32 %v647, %v647
        %v876 = vmul.f32 %v537, %v537
        %v877 = vmul.f32 %v650, %v650
        %v878 = vadd.f32 %v814, %v816
        %v879 = vadd.f32 %v878, %v818
        %v880 = vadd.f32 %v879, %v820
        %v881 = vadd.f32 %v880, %v822
        %v882 = vadd.f32 %v881, %v824
        %v883 = vadd.f32 %v882, %v826
        %v884 = vadd.f32 %v883, %v828
        %v885 = vadd.f32 %v884, %v830
        %v886 = vadd.f32 %v885, %v832
        %v887 = vadd.f32 %v886, %v834
        %v888 = vadd.f32 %v887, %v836
        %v889 = vadd.f32 %v888, %v838
        %v890 = vadd.f32 %v889, %v840
        %v891 = vadd.f32 %v890, %v842
        %v892 = vadd.f32 %v891, %v844
        %v893 = vadd.f32 %v892, %v846
        %v894 = vadd.f32 %v893, %v848
        %v895 = vadd.f32 %v894, %v850
        %v896 = vadd.f32 %v895, %v852
        %v897 = vadd.f32 %v896, %v854
        %v898 = vadd.f32 %v897, %v856
        %v899 = vadd.f32 %v898, %v858
        %v900 = vadd.f32 %v899, %v860
        %v901 = vadd.f32 %v900, %v862
        %v902 = vadd.f32 %v901, %v864
        %v903 = vadd.f32 %v902, %v866
        %v904 = vadd.f32 %v903, %v868
        %v905 = vadd.f32 %v904, %v870
        %v906 = vadd.f32 %v905, %v872
        %v907 = vadd.f32 %v906, %v874
        %v908 = vadd.f32 %v907, %v876
        %v909 = vrot.slane %v908, 4
        %v910 = vadd.f32 %v908, %v909
        %v911 = vrot.slane %v910, 2
        %v912 = vadd.f32 %v910, %v911
        %v913 = vrot.slane %v912, 1
        %v914 = vadd.f32 %v912, %v913
        %v915 = vadd.f32 %v815, %v817
        %v916 = vadd.f32 %v915, %v819
        %v917 = vadd.f32 %v916, %v821
        %v918 = vadd.f32 %v917, %v823
        %v919 = vadd.f32 %v918, %v825
        %v920 = vadd.f32 %v919, %v827
        %v921 = vadd.f32 %v920, %v829
        %v922 = vadd.f32 %v921, %v831
        %v923 = vadd.f32 %v922, %v833
        %v924 = vadd.f32 %v923, %v835
        %v925 = vadd.f32 %v924, %v837
        %v926 = vadd.f32 %v925, %v839
        %v927 = vadd.f32 %v926, %v841
        %v928 = vadd.f32 %v927, %v843
        %v929 = vadd.f32 %v928, %v845
        %v930 = vadd.f32 %v929, %v847
        %v931 = vadd.f32 %v930, %v849
        %v932 = vadd.f32 %v931, %v851
        %v933 = vadd.f32 %v932, %v853
        %v934 = vadd.f32 %v933, %v855
        %v935 = vadd.f32 %v934, %v857
        %v936 = vadd.f32 %v935, %v859
        %v937 = vadd.f32 %v936, %v861
        %v938 = vadd.f32 %v937, %v863
        %v939 = vadd.f32 %v938, %v865
        %v940 = vadd.f32 %v939, %v867
        %v941 = vadd.f32 %v940, %v869
        %v942 = vadd.f32 %v941, %v871
        %v943 = vadd.f32 %v942, %v873
        %v944 = vadd.f32 %v943, %v875
        %v945 = vadd.f32 %v944, %v877
        %v946 = vrot.slane %v945, 4
        %v947 = vadd.f32 %v945, %v946
        %v948 = vrot.slane %v947, 2
        %v949 = vadd.f32 %v947, %v948
        %v950 = vrot.slane %v949, 1
        %v951 = vadd.f32 %v949, %v950
        %v954 = vrot.slane %v951, 7
        %v955 = vsel %vm804, %v914, %v954
        %v957 = vadd.f32 %v813, %v955
        %958 = vst.msk [vmem:[%s267] sm:$0x3] %vm811, %v957
        %s959 = sand.u32 %s97, 1
        %s960 = scalar_lea.sflag [#allocation3], %s959
        %s961 = sand.u32 %s97, 1
        %s962 = smul.addr %s961, 256
        %s963 = scalar_lea.vmem [#allocation2], %s962
        %s964 = sand.u32 %s26, 1
        %s965 = scalar_lea.sflag [#allocation5], %s964
        %s966 = sand.u32 %s125, 1
        %s967 = smul.addr %s966, 256
        %s968 = scalar_lea.vmem [#allocation4], %s967
        %s969 = sand.u32 %s26, 1
        %s970 = scalar_lea.sflag [#allocation5], %s969
        %s971 = sand.u32 %s151, 1
        %s972 = smul.addr %s971, 2
        %s973 = scalar_lea.vmem [#allocation6], %s972
        %s974 = sand.u32 %s177, 1
        %s975 = scalar_lea.sflag [#allocation8], %s974
        %s976 = sand.u32 %s177, 1
        %s977 = smul.addr %s976, 2
        %s978 = scalar_lea.vmem [#allocation7], %s977
        // Predicated region
        $region33: #{tpu_custom_call.1} parent=27 // pred_check
          %p979 = pneg %p107
        $region34: #{tpu_custom_call.1} parent=27 // pred_check_branch
          %981 = sbr.rel (%p979) target = $region36
        $region35: #{tpu_custom_call.1} parent=27 // pred_region
          %s982 = sadd.s32 %s30, %s31
          %s983 = smul.u32 32, %s982
          %985 = vsyncadd %s960, 0
          %s986 = smul.addr %s983, 8
          %s987 = scalar_lea.hbm %s2, %s986
          %s988 = sshll.u32 %s963, 4
          %s989 = int_to_ptr.vmem [resolvable:$true] %s988
          %s990 = sshll.u32 %s987, 4
          %s991 = int_to_ptr.hbm [resolvable:$true] %s990
          %996 = dma.vmem_to_hbm [thread:$0]  %s989, 4096, %s991, %s960, 128, 128, 8
        $region36: #{tpu_custom_call.1} parent=27 // pred_fallthru
          _
        // Predicated region
        $region37: #{tpu_custom_call.1} parent=27 // pred_check
          %p997 = pneg %p135
        $region38: #{tpu_custom_call.1} parent=27 // pred_check_branch
          %999 = sbr.rel (%p997) target = $region40
        $region39: #{tpu_custom_call.1} parent=27 // pred_region
          %s1000 = sadd.s32 %s30, %s31
          %s1001 = smul.u32 32, %s1000
          %1003 = vsyncadd %s965, 0
          %s1004 = smul.addr %s1001, 8
          %s1005 = scalar_lea.hbm %s3, %s1004
          %s1006 = sshll.u32 %s968, 4
          %s1007 = int_to_ptr.vmem [resolvable:$true] %s1006
          %s1008 = sshll.u32 %s1005, 4
          %s1009 = int_to_ptr.hbm [resolvable:$true] %s1008
          %1014 = dma.vmem_to_hbm [thread:$0]  %s1007, 4096, %s1009, %s965, 128, 128, 8
        $region40: #{tpu_custom_call.1} parent=27 // pred_fallthru
          _
        // Predicated region
        $region41: #{tpu_custom_call.1} parent=27 // pred_check
          %p1015 = pneg %p161
        $region42: #{tpu_custom_call.1} parent=27 // pred_check_branch
          %1017 = sbr.rel (%p1015) target = $region44
        $region43: #{tpu_custom_call.1} parent=27 // pred_region
          %1019 = vsyncadd %s970, 0
          %s1020 = smul.addr %s30, 2
          %s1021 = scalar_lea.hbm %s4, %s1020
          %s1023 = sshll.u32 %s973, 4
          %s1024 = int_to_ptr.vmem [resolvable:$true] %s1023
          %s1025 = sshll.u32 %s1021, 4
          %s1026 = int_to_ptr.hbm [resolvable:$true] %s1025
          %1028 = dma.vmem_to_hbm [thread:$0]  %s1024, 32, %s1026, %s970
        $region44: #{tpu_custom_call.1} parent=27 // pred_fallthru
          _
        // Predicated region
        $region45: #{tpu_custom_call.1} parent=27 // pred_check
          %p1029 = pneg %p187
        $region46: #{tpu_custom_call.1} parent=27 // pred_check_branch
          %1031 = sbr.rel (%p1029) target = $region48
        $region47: #{tpu_custom_call.1} parent=27 // pred_region
          %1033 = vsyncadd %s975, 0
          %s1034 = smul.addr %s30, 2
          %s1035 = scalar_lea.hbm %s5, %s1034
          %s1037 = sshll.u32 %s978, 4
          %s1038 = int_to_ptr.vmem [resolvable:$true] %s1037
          %s1039 = sshll.u32 %s1035, 4
          %s1040 = int_to_ptr.hbm [resolvable:$true] %s1039
          %1042 = dma.vmem_to_hbm [thread:$0]  %s1038, 32, %s1040, %s975
        $region48: #{tpu_custom_call.1} parent=27 // pred_fallthru
          _
      $region28: #{tpu_custom_call.1} parent=5 // pred_fallthru
        _
      %p1043 = scmp.le.s32.totalorder 2, %s21
      // Predicated region
      $region49: #{tpu_custom_call.1} parent=5 // pred_check
        %p1044 = pneg %p1043
      $region50: #{tpu_custom_call.1} parent=5 // pred_check_branch
        %1046 = sbr.rel (%p1044) target = $region52
      $region51: #{tpu_custom_call.1} parent=5 // pred_region
        %s1047 = ssub.s32 %s21, 2
        // Predicated region
        $region53: #{tpu_custom_call.1} parent=51 // pred_check
          %p1048 = pneg %p113
        $region54: #{tpu_custom_call.1} parent=51 // pred_check_branch
          %1050 = sbr.rel (%p1048) target = $region56
        $region55: #{tpu_custom_call.1} parent=51 // pred_region
          %s1051 = sand.u32 %s98, 1
          %s1052 = scalar_lea.sflag [#allocation3], %s1051
          %s1053 = sand.u32 %s98, 1
          %s1054 = smul.addr %s1053, 256
          %s1055 = scalar_lea.vmem [#allocation2], %s1054
          %1057 = dma.done %s1052, 4096
        $region56: #{tpu_custom_call.1} parent=51 // pred_fallthru
          _
        // Predicated region
        $region57: #{tpu_custom_call.1} parent=51 // pred_check
          %p1058 = pneg %p141
        $region58: #{tpu_custom_call.1} parent=51 // pred_check_branch
          %1060 = sbr.rel (%p1058) target = $region60
        $region59: #{tpu_custom_call.1} parent=51 // pred_region
          %s1061 = sand.u32 %s27, 1
          %s1062 = scalar_lea.sflag [#allocation5], %s1061
          %s1063 = sand.u32 %s126, 1
          %s1064 = smul.addr %s1063, 256
          %s1065 = scalar_lea.vmem [#allocation4], %s1064
          %1067 = dma.done %s1062, 4096
        $region60: #{tpu_custom_call.1} parent=51 // pred_fallthru
          _
        // Predicated region
        $region61: #{tpu_custom_call.1} parent=51 // pred_check
          %p1068 = pneg %p167
        $region62: #{tpu_custom_call.1} parent=51 // pred_check_branch
          %1070 = sbr.rel (%p1068) target = $region64
        $region63: #{tpu_custom_call.1} parent=51 // pred_region
          %s1071 = sand.u32 %s27, 1
          %s1072 = scalar_lea.sflag [#allocation5], %s1071
          %s1073 = sand.u32 %s152, 1
          %s1074 = smul.addr %s1073, 2
          %s1075 = scalar_lea.vmem [#allocation6], %s1074
          %1077 = dma.done %s1072, 32
        $region64: #{tpu_custom_call.1} parent=51 // pred_fallthru
          _
        // Predicated region
        $region65: #{tpu_custom_call.1} parent=51 // pred_check
          %p1078 = pneg %p193
        $region66: #{tpu_custom_call.1} parent=51 // pred_check_branch
          %1080 = sbr.rel (%p1078) target = $region68
        $region67: #{tpu_custom_call.1} parent=51 // pred_region
          %s1081 = sand.u32 %s178, 1
          %s1082 = scalar_lea.sflag [#allocation8], %s1081
          %s1083 = sand.u32 %s178, 1
          %s1084 = smul.addr %s1083, 2
          %s1085 = scalar_lea.vmem [#allocation7], %s1084
          %1087 = dma.done %s1082, 32
        $region68: #{tpu_custom_call.1} parent=51 // pred_fallthru
          _
      $region52: #{tpu_custom_call.1} parent=5 // pred_fallthru
        _
    $region6: #{tpu_custom_call.1} parent=1 // loop_footer
      %s25 = sadd.s32 1, %s21
    $region7: #{tpu_custom_call.1} parent=1 // loop_footer_branch
      %20 = sbr.rel target = $region3
    $region8: #{tpu_custom_call.1} parent=1 // loop_exit
      _
    %1088 = vsyncpa [#allocation3], 1
    %s1089 = scalar_lea.sflag [#allocation3], 1
    %1090 = vsyncpa %s1089, 1
    %1091 = vsyncpa [#allocation5], 1
    %s1092 = scalar_lea.sflag [#allocation5], 1
    %1093 = vsyncpa %s1092, 1
    %1094 = vsyncpa [#allocation8], 1
    %s1095 = scalar_lea.sflag [#allocation8], 1
    %1096 = vsyncpa %s1095, 1

</llo_original>
